<compile_context>
chip_gen: v5e
topology: v5e:2x2
jax: 0.10.0
libtpu: 0.0.40
codegen_flags: <defaults>
</compile_context>

<pallas_src>
import jax
import jax.numpy as jnp
from jax.experimental import pallas as pl
from jax.experimental.pallas import tpu as pltpu
from functools import partial

# ---------------- hyper-params (small, consistent with the module) ------------
VOCAB_SIZE  = 100
WORD_DIM    = 32
DOC_LEN     = 24            # multiple of 8 -> the (TB, DOC_LEN, F) reshape is free
KERNEL_SIZE = 3
FILTERS_NUM = 16
FC_DIM      = 8
BATCH       = 2
NUM_TOWERS  = 2             # user tower, item tower
L_OUT       = DOC_LEN - KERNEL_SIZE + 1            # valid conv output length


# ---------------- Pallas kernel: one tower / one batch tile per grid step -----
def _deepconn_tower_kernel(emb_ref, cw_ref, cb_ref, fw_ref, fb_ref, out_ref, *, tb):
    # emb_ref : (tb*DOC_LEN, WORD_DIM) f32  -- rows ordered (batch, position)
    # cw_ref  : (KERNEL_SIZE*WORD_DIM, FILTERS_NUM)
    # cb_ref  : (1, FILTERS_NUM)
    # fw_ref  : (FILTERS_NUM, FC_DIM)
    # fb_ref  : (1, FC_DIM)
    # out_ref : (tb, FC_DIM)
    n_rows = tb * DOC_LEN
    emb = emb_ref[...]

    # --- im2col slab: lane-concat of sublane-rotated copies (XLU roll) -------
    # part k, row i == emb[(i + k) % n_rows]; rows that wrap across a document
    # boundary correspond to invalid conv positions and are masked before the
    # max-pool below.
    parts = [emb]
    for k in range(1, KERNEL_SIZE):
        parts.append(pltpu.roll(emb, shift=n_rows - k, axis=0))
    slab = jnp.concatenate(parts, axis=-1)               # (tb*DOC_LEN, KS*WD)

    # --- conv as one MXU matmul (bf16 operands, f32 accumulation) ------------
    conv = jnp.dot(slab.astype(jnp.bfloat16),
                   cw_ref[...].astype(jnp.bfloat16),
                   preferred_element_type=jnp.float32)    # (tb*DOC_LEN, F)
    conv = jnp.maximum(conv + cb_ref[...], 0.0)           # bias + ReLU (f32)

    # --- max_pool1d over the L_OUT valid positions of each document ----------
    # Mask wrapped rows (pos >= L_OUT) to 0: safe because post-ReLU values and
    # the true max are both >= 0.  (Use -inf pre-ReLU if ReLU ever moves.)
    pos = jax.lax.broadcasted_iota(jnp.int32, (n_rows, 1), 0) % DOC_LEN
    conv = jnp.where(pos < L_OUT, conv, 0.0)
    pooled = jnp.max(conv.reshape(tb, DOC_LEN, FILTERS_NUM), axis=1)   # (tb, F)

    # --- FC layer, batched over the whole tile --------------------------------
    y = jnp.dot(pooled.astype(jnp.bfloat16),
                fw_ref[...].astype(jnp.bfloat16),
                preferred_element_type=jnp.float32) + fb_ref[...]      # (tb, FC)
    # TODO(synk): for production TB >= 128, emit (FC_DIM, TB) (batch on lanes)
    # and transpose in the wrapper so the store is unmasked/lane-dense; at
    # TB=2 the current (TB, FC_DIM) layout is already the denser one.
    out_ref[...] = y.astype(out_ref.dtype)


def deepconn_towers(emb_flat, conv_w, conv_b, fc_w, fc_b):
    """emb_flat: (2, B*DOC_LEN, WORD_DIM) f32 -> (2, B, FC_DIM) f32."""
    B = emb_flat.shape[1] // DOC_LEN
    # Whole batch in one tile at these toy sizes.  For production sizes pick
    # TB so that (emb tile + 3x slab + conv intermediate), double-buffered,
    # fits scoped VMEM — on v7x that is 64 MiB physical / 32 MiB default
    # scoped, i.e. roughly half of a v6e-sized tile (or raise
    # pltpu.CompilerParams(vmem_limit_bytes=...) and re-derive TB).
    TB = B

    flops = NUM_TOWERS * (2 * B * DOC_LEN * KERNEL_SIZE * WORD_DIM * FILTERS_NUM
                          + 2 * B * FILTERS_NUM * FC_DIM)
    bytes_accessed = 4 * (emb_flat.size + conv_w.size + conv_b.size
                          + fc_w.size + fc_b.size + NUM_TOWERS * B * FC_DIM)

    return pl.pallas_call(
        partial(_deepconn_tower_kernel, tb=TB),
        out_shape=jax.ShapeDtypeStruct((NUM_TOWERS, B, FC_DIM), jnp.float32),
        grid_spec=pl.GridSpec(
            grid=(NUM_TOWERS, B // TB),          # towers x batch tiles
            in_specs=[
                pl.BlockSpec((pl.Squeezed(), TB * DOC_LEN, WORD_DIM),
                             lambda t, b: (t, b, 0)),
                pl.BlockSpec((pl.Squeezed(), KERNEL_SIZE * WORD_DIM, FILTERS_NUM),
                             lambda t, b: (t, 0, 0)),
                pl.BlockSpec((pl.Squeezed(), 1, FILTERS_NUM),
                             lambda t, b: (t, 0, 0)),
                pl.BlockSpec((pl.Squeezed(), FILTERS_NUM, FC_DIM),
                             lambda t, b: (t, 0, 0)),
                pl.BlockSpec((pl.Squeezed(), 1, FC_DIM),
                             lambda t, b: (t, 0, 0)),
            ],
            out_specs=pl.BlockSpec((pl.Squeezed(), TB, FC_DIM),
                                   lambda t, b: (t, b, 0)),
        ),
        compiler_params=pltpu.CompilerParams(
            dimension_semantics=("parallel", "parallel")),
        cost_estimate=pl.CostEstimate(flops=flops, transcendentals=0,
                                      bytes_accessed=bytes_accessed),
    )(emb_flat, conv_w, conv_b, fc_w, fc_b)


# ---------------- parameter init (mirrors reset_para, deterministic) ----------
def init_params(key):
    ks = jax.random.split(key, 6)
    # embeddings: uniform(-0.1, 0.1)
    user_emb = jax.random.uniform(ks[0], (VOCAB_SIZE, WORD_DIM), jnp.float32, -0.1, 0.1)
    item_emb = jax.random.uniform(ks[1], (VOCAB_SIZE, WORD_DIM), jnp.float32, -0.1, 0.1)

    # conv weights: xavier normal on (F, 1, ks, word_dim); bias 0.1.
    fan_in = 1 * KERNEL_SIZE * WORD_DIM
    fan_out = FILTERS_NUM * KERNEL_SIZE * WORD_DIM
    std = (2.0 / (fan_in + fan_out)) ** 0.5

    def conv_init(k):
        w = std * jax.random.normal(k, (FILTERS_NUM, 1, KERNEL_SIZE, WORD_DIM),
                                    jnp.float32)
        # -> (ks, word_dim, F) -> (ks*word_dim, F) to match the im2col slab layout
        return jnp.transpose(w[:, 0, :, :], (1, 2, 0)).reshape(
            KERNEL_SIZE * WORD_DIM, FILTERS_NUM)

    conv_w = jnp.stack([conv_init(ks[2]), conv_init(ks[3])], axis=0)   # (2, ks*WD, F)
    conv_b = jnp.full((NUM_TOWERS, 1, FILTERS_NUM), 0.1, jnp.float32)

    # fc: uniform(-0.1, 0.1) on (fc_dim, F) torch layout -> transpose; bias 0.1
    def fc_init(k):
        w = jax.random.uniform(k, (FC_DIM, FILTERS_NUM), jnp.float32, -0.1, 0.1)
        return w.T

    fc_w = jnp.stack([fc_init(ks[4]), fc_init(ks[5])], axis=0)          # (2, F, FC)
    fc_b = jnp.full((NUM_TOWERS, 1, FC_DIM), 0.1, jnp.float32)

    return dict(user_emb=user_emb, item_emb=item_emb,
                conv_w=conv_w, conv_b=conv_b, fc_w=fc_w, fc_b=fc_b)


# ---------------- full forward (glue: embedding gather, stacking) -------------
@jax.jit
def deepconn_forward(params, user_doc, item_doc):
    # Embedding lookup is a gather -> plain JAX glue (see TODO at top of file).
    u_emb = params["user_emb"][user_doc.reshape(-1)]    # (B*DOC_LEN, WORD_DIM)
    i_emb = params["item_emb"][item_doc.reshape(-1)]
    emb = jnp.stack([u_emb, i_emb], axis=0)             # (2, B*DOC_LEN, WORD_DIM)

    feats = deepconn_towers(emb, params["conv_w"], params["conv_b"],
                            params["fc_w"], params["fc_b"])   # (2, B, FC_DIM)
    u_fea, i_fea = feats[0], feats[1]
    # dropout = identity (eval mode); torch.stack([x], 1) -> singleton axis
    return u_fea[:, None, :], i_fea[:, None, :]


# ---------------- pure-JAX f32 reference for a sanity check -------------------
def reference_tower(doc_emb, cw_flat, cb, fw, fb):
    # doc_emb: (B, DOC_LEN, WORD_DIM); cw_flat: (ks*WD, F); cb: (1, F)
    cw = cw_flat.reshape(KERNEL_SIZE, WORD_DIM, FILTERS_NUM)
    acc = jnp.zeros((doc_emb.shape[0], L_OUT, FILTERS_NUM), jnp.float32)
    for k in range(KERNEL_SIZE):
        acc = acc + jnp.einsum("btd,df->btf", doc_emb[:, k:k + L_OUT, :], cw[k])
    acc = jnp.maximum(acc + cb[None], 0.0)              # (B, L_OUT, F)
    pooled = jnp.max(acc, axis=1)                       # (B, F)
    return pooled @ fw + fb                             # (B, FC_DIM)


if __name__ == "__main__":
    key = jax.random.PRNGKey(0)
    pkey, dkey1, dkey2 = jax.random.split(key, 3)
    params = init_params(pkey)

    user_doc = jax.random.randint(dkey1, (BATCH, DOC_LEN), 0, VOCAB_SIZE, jnp.int32)
    item_doc = jax.random.randint(dkey2, (BATCH, DOC_LEN), 0, VOCAB_SIZE, jnp.int32)

    u_out, i_out = deepconn_forward(params, user_doc, item_doc)
    u_out, i_out = jax.block_until_ready((u_out, i_out))

    # sanity check vs pure-f32 JAX reference; tolerance loosened because the
    # kernel uses bf16 MXU operands (f32 accumulation), per the perf review.
    u_ref = reference_tower(params["user_emb"][user_doc], params["conv_w"][0],
                            params["conv_b"][0], params["fc_w"][0], params["fc_b"][0])
    i_ref = reference_tower(params["item_emb"][item_doc], params["conv_w"][1],
                            params["conv_b"][1], params["fc_w"][1], params["fc_b"][1])
    assert u_out.shape == (BATCH, 1, FC_DIM) and i_out.shape == (BATCH, 1, FC_DIM)
    assert jnp.allclose(u_out[:, 0, :], u_ref, atol=3e-3, rtol=1e-2)
    assert jnp.allclose(i_out[:, 0, :], i_ref, atol=3e-3, rtol=1e-2)

    print("KERNEL_OK")
</pallas_src>

<mosaic_0001>
module attributes {stable_mosaic.version = 11 : i64} {
  func.func @_deepconn_tower_kernel(%arg0: i32, %arg1: i32, %arg2: memref<1x48x32xf32, #tpu.memory_space<vmem>>, %arg3: memref<1x96x16xf32, #tpu.memory_space<vmem>>, %arg4: memref<1x1x16xf32, #tpu.memory_space<vmem>>, %arg5: memref<1x16x8xf32, #tpu.memory_space<vmem>>, %arg6: memref<1x1x8xf32, #tpu.memory_space<vmem>>, %arg7: memref<1x2x8xf32, #tpu.memory_space<vmem>>) attributes {dimension_semantics = [#tpu.dimension_semantics<parallel>, #tpu.dimension_semantics<parallel>], iteration_bounds = array<i64: 2, 1>, scalar_prefetch = 0 : i64, scratch_operands = 0 : i64, tpu.core_type = #tpu.core_type<tc>, window_params = [{transform_indices = @transform_0, window_bounds = array<i64: 1, 48, 32>}, {transform_indices = @transform_1, window_bounds = array<i64: 1, 96, 16>}, {transform_indices = @transform_2, window_bounds = array<i64: 1, 1, 16>}, {transform_indices = @transform_3, window_bounds = array<i64: 1, 16, 8>}, {transform_indices = @transform_4, window_bounds = array<i64: 1, 1, 8>}, {transform_indices = @transform_5, window_bounds = array<i64: 1, 2, 8>}]} {
    %c0 = arith.constant 0 : index
    %c0_0 = arith.constant 0 : index
    %c0_1 = arith.constant 0 : index
    %0 = vector.load %arg2[%c0, %c0_0, %c0_1] : memref<1x48x32xf32, #tpu.memory_space<vmem>>, vector<1x48x32xf32>
    %1 = vector.shape_cast %0 : vector<1x48x32xf32> to vector<48x32xf32>
    %c47_i32 = arith.constant 47 : i32
    %2 = tpu.dynamic_rotate %1 by %c47_i32 dim 0 : vector<48x32xf32>, i32 -> vector<48x32xf32>
    %c46_i32 = arith.constant 46 : i32
    %3 = tpu.dynamic_rotate %1 by %c46_i32 dim 0 : vector<48x32xf32>, i32 -> vector<48x32xf32>
    %4 = tpu.concatenate %1, %2, %3 in 1 : vector<48x32xf32>, vector<48x32xf32>, vector<48x32xf32> -> vector<48x96xf32>
    %5 = arith.truncf %4 : vector<48x96xf32> to vector<48x96xbf16>
    %c0_2 = arith.constant 0 : index
    %c0_3 = arith.constant 0 : index
    %c0_4 = arith.constant 0 : index
    %6 = vector.load %arg3[%c0_2, %c0_3, %c0_4] : memref<1x96x16xf32, #tpu.memory_space<vmem>>, vector<1x96x16xf32>
    %7 = vector.shape_cast %6 : vector<1x96x16xf32> to vector<96x16xf32>
    %8 = arith.truncf %7 : vector<96x16xf32> to vector<96x16xbf16>
    %cst = arith.constant dense<0.000000e+00> : vector<48x16xf32>
    %9 = tpu.matmul %5, %8, %cst {dimension_numbers = #tpu.dot_dimension_numbers<[1], [0], [0], [1], [0, 0, 1, 1], [], []>} : vector<48x96xbf16>, vector<96x16xbf16>, vector<48x16xf32> -> vector<48x16xf32>
    %c0_5 = arith.constant 0 : index
    %c0_6 = arith.constant 0 : index
    %c0_7 = arith.constant 0 : index
    %10 = vector.load %arg4[%c0_5, %c0_6, %c0_7] : memref<1x1x16xf32, #tpu.memory_space<vmem>>, vector<1x1x16xf32>
    %11 = vector.shape_cast %10 : vector<1x1x16xf32> to vector<1x16xf32>
    %12 = vector.broadcast %11 : vector<1x16xf32> to vector<48x16xf32>
    %13 = arith.addf %9, %12 : vector<48x16xf32>
    %cst_8 = arith.constant 0.000000e+00 : f32
    %14 = vector.broadcast %cst_8 : f32 to vector<48x16xf32>
    %15 = arith.maximumf %13, %14 : vector<48x16xf32>
    %16 = tpu.iota {dimensions = array<i32: 0>} : vector<48x1xi32>
    %c24_i32 = arith.constant 24 : i32
    %c0_i32 = arith.constant 0 : i32
    %17 = arith.cmpi eq, %c24_i32, %c0_i32 : i32
    %c1_i32 = arith.constant 1 : i32
    %18 = arith.select %17, %c1_i32, %c24_i32 : i32
    %19 = vector.broadcast %18 : i32 to vector<48x1xi32>
    %20 = arith.remsi %16, %19 : vector<48x1xi32>
    %c0_i32_9 = arith.constant 0 : i32
    %21 = vector.broadcast %c0_i32_9 : i32 to vector<48x1xi32>
    %22 = arith.cmpi ne, %20, %21 : vector<48x1xi32>
    %c0_i32_10 = arith.constant 0 : i32
    %23 = vector.broadcast %c0_i32_10 : i32 to vector<48x1xi32>
    %24 = arith.cmpi slt, %20, %23 : vector<48x1xi32>
    %c0_i32_11 = arith.constant 0 : i32
    %25 = arith.cmpi slt, %18, %c0_i32_11 : i32
    %26 = vector.broadcast %25 : i1 to vector<48x1xi1>
    %27 = vector.broadcast %26 : vector<48x1xi1> to vector<48x1xi1>
    %28 = arith.xori %24, %27 : vector<48x1xi1>
    %29 = arith.andi %28, %22 : vector<48x1xi1>
    %30 = vector.broadcast %18 : i32 to vector<48x1xi32>
    %31 = arith.addi %20, %30 : vector<48x1xi32>
    %32 = arith.select %29, %31, %20 : vector<48x1xi1>, vector<48x1xi32>
    %c22_i32 = arith.constant 22 : i32
    %33 = vector.broadcast %c22_i32 : i32 to vector<48x1xi32>
    %34 = arith.cmpi slt, %32, %33 : vector<48x1xi32>
    %cst_12 = arith.constant 0.000000e+00 : f32
    %35 = vector.shape_cast %34 : vector<48x1xi1> to vector<48x1xi1>
    %36 = vector.broadcast %35 : vector<48x1xi1> to vector<48x16xi1>
    %37 = vector.broadcast %cst_12 : f32 to vector<48x16xf32>
    %38 = arith.select %36, %15, %37 : vector<48x16xi1>, vector<48x16xf32>
    %39 = vector.shape_cast %38 : vector<48x16xf32> to vector<2x24x16xf32>
    %cst_13 = arith.constant dense<0xFF800000> : vector<2x16xf32>
    %40 = vector.multi_reduction <maximumf>, %39, %cst_13 [1] : vector<2x24x16xf32> to vector<2x16xf32>
    %41 = arith.truncf %40 : vector<2x16xf32> to vector<2x16xbf16>
    %c0_14 = arith.constant 0 : index
    %c0_15 = arith.constant 0 : index
    %c0_16 = arith.constant 0 : index
    %42 = vector.load %arg5[%c0_14, %c0_15, %c0_16] : memref<1x16x8xf32, #tpu.memory_space<vmem>>, vector<1x16x8xf32>
    %43 = vector.shape_cast %42 : vector<1x16x8xf32> to vector<16x8xf32>
    %44 = arith.truncf %43 : vector<16x8xf32> to vector<16x8xbf16>
    %cst_17 = arith.constant dense<0.000000e+00> : vector<2x8xf32>
    %45 = tpu.matmul %41, %44, %cst_17 {dimension_numbers = #tpu.dot_dimension_numbers<[1], [0], [0], [1], [0, 0, 1, 1], [], []>} : vector<2x16xbf16>, vector<16x8xbf16>, vector<2x8xf32> -> vector<2x8xf32>
    %c0_18 = arith.constant 0 : index
    %c0_19 = arith.constant 0 : index
    %c0_20 = arith.constant 0 : index
    %46 = vector.load %arg6[%c0_18, %c0_19, %c0_20] : memref<1x1x8xf32, #tpu.memory_space<vmem>>, vector<1x1x8xf32>
    %47 = vector.shape_cast %46 : vector<1x1x8xf32> to vector<1x8xf32>
    %48 = vector.broadcast %47 : vector<1x8xf32> to vector<2x8xf32>
    %49 = arith.addf %45, %48 : vector<2x8xf32>
    %c0_21 = arith.constant 0 : index
    %c0_22 = arith.constant 0 : index
    %c0_23 = arith.constant 0 : index
    %50 = vector.load %arg7[%c0_21, %c0_22, %c0_23] : memref<1x2x8xf32, #tpu.memory_space<vmem>>, vector<1x2x8xf32>
    %51 = vector.shape_cast %50 : vector<1x2x8xf32> to vector<2x8xf32>
    %52 = vector.shape_cast %49 : vector<2x8xf32> to vector<1x2x8xf32>
    tpu.vector_store %arg7[%c0_21, %c0_22, %c0_23], %52 {strides = array<i32>} : memref<1x2x8xf32, #tpu.memory_space<vmem>>, vector<1x2x8xf32>,
    return
  }
  func.func @transform_0(%arg0: i32, %arg1: i32) -> (i32, i32, i32) {
    %c0_i32 = arith.constant 0 : i32
    %c0_i32_0 = arith.constant 0 : i32
    return %arg0, %arg1, %c0_i32 : i32, i32, i32
  }
  func.func @transform_1(%arg0: i32, %arg1: i32) -> (i32, i32, i32) {
    %c0_i32 = arith.constant 0 : i32
    %c0_i32_0 = arith.constant 0 : i32
    %c0_i32_1 = arith.constant 0 : i32
    return %arg0, %c0_i32, %c0_i32_0 : i32, i32, i32
  }
  func.func @transform_2(%arg0: i32, %arg1: i32) -> (i32, i32, i32) {
    %c0_i32 = arith.constant 0 : i32
    %c0_i32_0 = arith.constant 0 : i32
    %c0_i32_1 = arith.constant 0 : i32
    return %arg0, %c0_i32, %c0_i32_0 : i32, i32, i32
  }
  func.func @transform_3(%arg0: i32, %arg1: i32) -> (i32, i32, i32) {
    %c0_i32 = arith.constant 0 : i32
    %c0_i32_0 = arith.constant 0 : i32
    %c0_i32_1 = arith.constant 0 : i32
    return %arg0, %c0_i32, %c0_i32_0 : i32, i32, i32
  }
  func.func @transform_4(%arg0: i32, %arg1: i32) -> (i32, i32, i32) {
    %c0_i32 = arith.constant 0 : i32
    %c0_i32_0 = arith.constant 0 : i32
    %c0_i32_1 = arith.constant 0 : i32
    return %arg0, %c0_i32, %c0_i32_0 : i32, i32, i32
  }
  func.func @transform_5(%arg0: i32, %arg1: i32) -> (i32, i32, i32) {
    %c0_i32 = arith.constant 0 : i32
    %c0_i32_0 = arith.constant 0 : i32
    return %arg0, %arg1, %c0_i32 : i32, i32, i32
  }
}

</mosaic_0001>

<llo_original>
// kernel: deepconn_forward.1
$region0: #{deepconn_forward.1}
  #allocation0 [shape = 'u32[]', space=smem, size = 0x4, offset = 0x4, fixed_abs, tag = 'smem constant byte address 0x4 - core index']
  #allocation1 [shape = 'u32[72,128]{1,0:T(1,128)}', space=vmem, size = 0x9000, scoped, tag = 'internal scratch']
  %s0 = inlined_call_operand.vmem [shape: f32[2,48,32], index: 0, kind: input, shape index: {}]
  %s1 = inlined_call_operand.vmem [shape: f32[2,96,16], index: 1, kind: input, shape index: {}]
  %s2 = inlined_call_operand.vmem [shape: f32[2,1,16], index: 2, kind: input, shape index: {}]
  %s3 = inlined_call_operand.vmem [shape: f32[2,16,8], index: 3, kind: input, shape index: {}]
  %s4 = inlined_call_operand.vmem [shape: f32[2,1,8], index: 4, kind: input, shape index: {}]
  %s5 = inlined_call_operand.vmem [shape: f32[2,2,8], index: 5, kind: output, shape index: {}]
  %s6 = sld [smem:[#allocation0]]
  $region53: #{deepconn_forward.1} parent=0
    _
  %s8 = ssub.s32 1, %s6
  %s9 = scalar_select 0, %s8, %s6
  loop: start=0, step=1, limit=4
  $region2: #{deepconn_forward.1} parent=0 // loop_pre_header
    _
  $region3: #{deepconn_forward.1} parent=0 // loop_header
    %s11 = sphi 0, %s15
    %p12 = scmp.ge.s32.totalorder %s11, 4
    %s18 = sphi 0, %s30
    %s19 = sphi 0, %s26
    %s20 = sphi 0, %s18
    %s21 = sphi 0, %s19
    %s22 = sphi 0, %s20
    %s23 = sphi 0, %s21
    %s35 = sphi 0, %s37
    %s38 = sphi 0, %s35
    %s39 = sphi 0, %s38
    %s55 = sphi 0, %s39
    %s61 = sphi 0, %s63
    %s64 = sphi 0, %s61
    %s65 = sphi 0, %s64
    %s81 = sphi 0, %s65
    %s87 = sphi 0, %s89
    %s90 = sphi 0, %s87
    %s91 = sphi 0, %s90
    %s107 = sphi 0, %s91
    %s113 = sphi 0, %s115
    %s116 = sphi 0, %s113
    %s117 = sphi 0, %s116
    %s133 = sphi 0, %s117
    %s139 = sphi 0, %s141
    %s142 = sphi 0, %s139
    %s143 = sphi 0, %s142
    %s159 = sphi 0, %s143
    %s167 = sphi 0, %s169
    %s170 = sphi 0, %s167
    %s171 = sphi 0, %s170
    %s187 = sphi 0, %s171
  $region4: #{deepconn_forward.1} parent=0 // loop_header_branch
    %14 = sbr.rel (%p12) target = $region8
  $region5: #{deepconn_forward.1} parent=0 // loop_body
    %s16 = ssub.s32 %s11, 1
    %s17 = ssub.s32 %s11, 2
    %s24 = sadd.s32 1, %s19
    %p25 = scmp.ge.s32.totalorder %s24, 1
    %s26 = scalar_select %p25, 0, %s24
    %s27 = sadd.s32 1, %s18
    %s28 = scalar_select %p25, %s27, %s18
    %p29 = scmp.ge.s32.totalorder %s28, 2
    %s30 = scalar_select %p29, 0, %s28
    %s31 = ssub.s32 %s18, %s30
    %s32 = ssub.s32 %s19, %s26
    %s33 = sor.u32 %s31, %s32
    %p34 = scmp.eq.s32.totalorder %s33, 0
    %s36 = sadd.s32 %s35, 1
    %s37 = scalar_select %p34, %s35, %s36
    %p40 = pneg %p34
    %p41 = scmp.eq.s32.totalorder %s11, 1
    %p42 = por %p40, %p41
    %p43 = scmp.ne.s32.totalorder %s35, %s38
    %p44 = scmp.eq.s32.totalorder %s11, 0
    %p45 = por %p43, %p44
    %p46 = scmp.ne.s32.totalorder %s35, %s38
    %p47 = scmp.eq.s32.totalorder %s16, 1
    %p48 = por %p46, %p47
    %p49 = scmp.ne.s32.totalorder %s38, %s39
    %p50 = scmp.eq.s32.totalorder %s16, 0
    %p51 = por %p49, %p50
    %p52 = scmp.ne.s32.totalorder %s38, %s39
    %p53 = scmp.eq.s32.totalorder %s17, 1
    %p54 = por %p52, %p53
    %p56 = scmp.ne.s32.totalorder %s39, %s55
    %p57 = scmp.eq.s32.totalorder %s17, 0
    %p58 = por %p56, %p57
    %s59 = ssub.s32 %s18, %s30
    %p60 = scmp.eq.s32.totalorder %s59, 0
    %s62 = sadd.s32 %s61, 1
    %s63 = scalar_select %p60, %s61, %s62
    %p66 = pneg %p60
    %p67 = scmp.eq.s32.totalorder %s11, 1
    %p68 = por %p66, %p67
    %p69 = scmp.ne.s32.totalorder %s61, %s64
    %p70 = scmp.eq.s32.totalorder %s11, 0
    %p71 = por %p69, %p70
    %p72 = scmp.ne.s32.totalorder %s61, %s64
    %p73 = scmp.eq.s32.totalorder %s16, 1
    %p74 = por %p72, %p73
    %p75 = scmp.ne.s32.totalorder %s64, %s65
    %p76 = scmp.eq.s32.totalorder %s16, 0
    %p77 = por %p75, %p76
    %p78 = scmp.ne.s32.totalorder %s64, %s65
    %p79 = scmp.eq.s32.totalorder %s17, 1
    %p80 = por %p78, %p79
    %p82 = scmp.ne.s32.totalorder %s65, %s81
    %p83 = scmp.eq.s32.totalorder %s17, 0
    %p84 = por %p82, %p83
    %s85 = ssub.s32 %s18, %s30
    %p86 = scmp.eq.s32.totalorder %s85, 0
    %s88 = sadd.s32 %s87, 1
    %s89 = scalar_select %p86, %s87, %s88
    %p92 = pneg %p86
    %p93 = scmp.eq.s32.totalorder %s11, 1
    %p94 = por %p92, %p93
    %p95 = scmp.ne.s32.totalorder %s87, %s90
    %p96 = scmp.eq.s32.totalorder %s11, 0
    %p97 = por %p95, %p96
    %p98 = scmp.ne.s32.totalorder %s87, %s90
    %p99 = scmp.eq.s32.totalorder %s16, 1
    %p100 = por %p98, %p99
    %p101 = scmp.ne.s32.totalorder %s90, %s91
    %p102 = scmp.eq.s32.totalorder %s16, 0
    %p103 = por %p101, %p102
    %p104 = scmp.ne.s32.totalorder %s90, %s91
    %p105 = scmp.eq.s32.totalorder %s17, 1
    %p106 = por %p104, %p105
    %p108 = scmp.ne.s32.totalorder %s91, %s107
    %p109 = scmp.eq.s32.totalorder %s17, 0
    %p110 = por %p108, %p109
    %s111 = ssub.s32 %s18, %s30
    %p112 = scmp.eq.s32.totalorder %s111, 0
    %s114 = sadd.s32 %s113, 1
    %s115 = scalar_select %p112, %s113, %s114
    %p118 = pneg %p112
    %p119 = scmp.eq.s32.totalorder %s11, 1
    %p120 = por %p118, %p119
    %p121 = scmp.ne.s32.totalorder %s113, %s116
    %p122 = scmp.eq.s32.totalorder %s11, 0
    %p123 = por %p121, %p122
    %p124 = scmp.ne.s32.totalorder %s113, %s116
    %p125 = scmp.eq.s32.totalorder %s16, 1
    %p126 = por %p124, %p125
    %p127 = scmp.ne.s32.totalorder %s116, %s117
    %p128 = scmp.eq.s32.totalorder %s16, 0
    %p129 = por %p127, %p128
    %p130 = scmp.ne.s32.totalorder %s116, %s117
    %p131 = scmp.eq.s32.totalorder %s17, 1
    %p132 = por %p130, %p131
    %p134 = scmp.ne.s32.totalorder %s117, %s133
    %p135 = scmp.eq.s32.totalorder %s17, 0
    %p136 = por %p134, %p135
    %s137 = ssub.s32 %s18, %s30
    %p138 = scmp.eq.s32.totalorder %s137, 0
    %s140 = sadd.s32 %s139, 1
    %s141 = scalar_select %p138, %s139, %s140
    %p144 = pneg %p138
    %p145 = scmp.eq.s32.totalorder %s11, 1
    %p146 = por %p144, %p145
    %p147 = scmp.ne.s32.totalorder %s139, %s142
    %p148 = scmp.eq.s32.totalorder %s11, 0
    %p149 = por %p147, %p148
    %p150 = scmp.ne.s32.totalorder %s139, %s142
    %p151 = scmp.eq.s32.totalorder %s16, 1
    %p152 = por %p150, %p151
    %p153 = scmp.ne.s32.totalorder %s142, %s143
    %p154 = scmp.eq.s32.totalorder %s16, 0
    %p155 = por %p153, %p154
    %p156 = scmp.ne.s32.totalorder %s142, %s143
    %p157 = scmp.eq.s32.totalorder %s17, 1
    %p158 = por %p156, %p157
    %p160 = scmp.ne.s32.totalorder %s143, %s159
    %p161 = scmp.eq.s32.totalorder %s17, 0
    %p162 = por %p160, %p161
    %s163 = ssub.s32 %s18, %s30
    %s164 = ssub.s32 %s19, %s26
    %s165 = sor.u32 %s163, %s164
    %p166 = scmp.eq.s32.totalorder %s165, 0
    %s168 = sadd.s32 %s167, 1
    %s169 = scalar_select %p166, %s167, %s168
    %p172 = pneg %p166
    %p173 = scmp.eq.s32.totalorder %s11, 1
    %p174 = por %p172, %p173
    %p175 = scmp.ne.s32.totalorder %s167, %s170
    %p176 = scmp.eq.s32.totalorder %s11, 0
    %p177 = por %p175, %p176
    %p178 = scmp.ne.s32.totalorder %s167, %s170
    %p179 = scmp.eq.s32.totalorder %s16, 1
    %p180 = por %p178, %p179
    %p181 = scmp.ne.s32.totalorder %s170, %s171
    %p182 = scmp.eq.s32.totalorder %s16, 0
    %p183 = por %p181, %p182
    %p184 = scmp.ne.s32.totalorder %s170, %s171
    %p185 = scmp.eq.s32.totalorder %s17, 1
    %p186 = por %p184, %p185
    %p188 = scmp.ne.s32.totalorder %s171, %s187
    %p189 = scmp.eq.s32.totalorder %s17, 0
    %p190 = por %p188, %p189
    %p191 = scmp.le.s32.totalorder 1, %s11
    %p192 = scmp.lt.s32.totalorder %s11, 3
    %p193 = pnand %p191, %p192
    %p194 = pneg %p193
    // Predicated region
    $region9: #{deepconn_forward.1} parent=5 // pred_check
      _
    $region10: #{deepconn_forward.1} parent=5 // pred_check_branch
      %196 = sbr.rel (%p193) target = $region12
    $region11: #{deepconn_forward.1} parent=5 // pred_region
      %s197 = ssub.s32 %s11, 1
    $region12: #{deepconn_forward.1} parent=5 // pred_fallthru
      _
    %p198 = scmp.lt.s32.totalorder %s11, 2
    // Predicated region
    $region13: #{deepconn_forward.1} parent=5 // pred_check
      %p199 = pneg %p198
    $region14: #{deepconn_forward.1} parent=5 // pred_check_branch
      %201 = sbr.rel (%p199) target = $region16
    $region15: #{deepconn_forward.1} parent=5 // pred_region
      // Predicated region
      $region17: #{deepconn_forward.1} parent=15 // pred_check
        %p202 = pneg %p45
      $region18: #{deepconn_forward.1} parent=15 // pred_check_branch
        %204 = sbr.rel (%p202) target = $region20
      $region19: #{deepconn_forward.1} parent=15 // pred_region
        %s205 = smul.u32 6, %s19
        %p206 = scmp.lt.s32.totalorder %s18, 1
        %s207 = scalar_select %p206, %s18, 1
        %p208 = scmp.lt.s32.totalorder %s205, 5
        %s209 = scalar_select %p208, %s205, 5
        %s210 = smul.addr %s207, 6
        %s211 = sadd.s32 %s209, %s210
        %s212 = smul.addr %s211, 8
        %s213 = scalar_lea.vmem %s0, %s212
        %s214 = smul.u32 6, %s19
      $region20: #{deepconn_forward.1} parent=15 // pred_fallthru
        _
      // Predicated region
      $region21: #{deepconn_forward.1} parent=15 // pred_check
        %p215 = pneg %p71
      $region22: #{deepconn_forward.1} parent=15 // pred_check_branch
        %217 = sbr.rel (%p215) target = $region24
      $region23: #{deepconn_forward.1} parent=15 // pred_region
        %p218 = scmp.lt.s32.totalorder %s18, 1
        %s219 = scalar_select %p218, %s18, 1
        %s220 = smul.addr %s219, 12
        %s221 = smul.addr %s220, 8
        %s222 = scalar_lea.vmem %s1, %s221
      $region24: #{deepconn_forward.1} parent=15 // pred_fallthru
        _
      // Predicated region
      $region25: #{deepconn_forward.1} parent=15 // pred_check
        %p223 = pneg %p97
      $region26: #{deepconn_forward.1} parent=15 // pred_check_branch
        %225 = sbr.rel (%p223) target = $region28
      $region27: #{deepconn_forward.1} parent=15 // pred_region
        %p226 = scmp.lt.s32.totalorder %s18, 1
        %s227 = scalar_select %p226, %s18, 1
        %s228 = scalar_lea.vmem %s2, %s227
      $region28: #{deepconn_forward.1} parent=15 // pred_fallthru
        _
      // Predicated region
      $region29: #{deepconn_forward.1} parent=15 // pred_check
        %p229 = pneg %p123
      $region30: #{deepconn_forward.1} parent=15 // pred_check_branch
        %231 = sbr.rel (%p229) target = $region32
      $region31: #{deepconn_forward.1} parent=15 // pred_region
        %p232 = scmp.lt.s32.totalorder %s18, 1
        %s233 = scalar_select %p232, %s18, 1
        %s234 = smul.addr %s233, 2
        %s235 = smul.addr %s234, 8
        %s236 = scalar_lea.vmem %s3, %s235
      $region32: #{deepconn_forward.1} parent=15 // pred_fallthru
        _
      // Predicated region
      $region33: #{deepconn_forward.1} parent=15 // pred_check
        %p237 = pneg %p149
      $region34: #{deepconn_forward.1} parent=15 // pred_check_branch
        %239 = sbr.rel (%p237) target = $region36
      $region35: #{deepconn_forward.1} parent=15 // pred_region
        %p240 = scmp.lt.s32.totalorder %s18, 1
        %s241 = scalar_select %p240, %s18, 1
        %s242 = scalar_lea.vmem %s4, %s241
      $region36: #{deepconn_forward.1} parent=15 // pred_fallthru
        _
    $region16: #{deepconn_forward.1} parent=5 // pred_fallthru
      _
    %p243 = scmp.le.s32.totalorder 1, %s11
    %p244 = scmp.lt.s32.totalorder %s11, 3
    %p245 = pnand %p243, %p244
    %p246 = pneg %p245
    // Predicated region
    $region37: #{deepconn_forward.1} parent=5 // pred_check
      _
    $region38: #{deepconn_forward.1} parent=5 // pred_check_branch
      %248 = sbr.rel (%p245) target = $region40
    $region39: #{deepconn_forward.1} parent=5 // pred_region
      %s249 = ssub.s32 %s11, 1
      %s250 = smul.u32 6, %s21
      %p251 = scmp.lt.s32.totalorder %s20, 1
      %s252 = scalar_select %p251, %s20, 1
      %p253 = scmp.lt.s32.totalorder %s250, 5
      %s254 = scalar_select %p253, %s250, 5
      %s255 = smul.addr %s252, 6
      %s256 = sadd.s32 %s254, %s255
      %s257 = smul.addr %s256, 8
      %s258 = scalar_lea.vmem %s0, %s257
      %p259 = pneg %p51
      %p260 = pneg %p48
      %p261 = scmp.lt.s32.totalorder %s20, 1
      %s262 = scalar_select %p261, %s20, 1
      %s263 = smul.addr %s262, 12
      %s264 = smul.addr %s263, 8
      %s265 = scalar_lea.vmem %s1, %s264
      %p266 = pneg %p77
      %p267 = pneg %p74
      %p268 = scmp.lt.s32.totalorder %s20, 1
      %s269 = scalar_select %p268, %s20, 1
      %s270 = scalar_lea.vmem %s2, %s269
      %p271 = pneg %p103
      %p272 = pneg %p100
      %p273 = scmp.lt.s32.totalorder %s20, 1
      %s274 = scalar_select %p273, %s20, 1
      %s275 = smul.addr %s274, 2
      %s276 = smul.addr %s275, 8
      %s277 = scalar_lea.vmem %s3, %s276
      %p278 = pneg %p129
      %p279 = pneg %p126
      %p280 = scmp.lt.s32.totalorder %s20, 1
      %s281 = scalar_select %p280, %s20, 1
      %s282 = scalar_lea.vmem %s4, %s281
      %p283 = pneg %p155
      %p284 = pneg %p152
      %p285 = pneg %p183
      %p286 = pneg %p180
      %p287 = scmp.lt.s32.totalorder %s20, 1
      %s288 = scalar_select %p287, %s20, 1
      %p289 = scmp.lt.s32.totalorder %s21, 0
      %s290 = scalar_select %p289, %s21, 0
      %s291 = sadd.s32 %s290, %s288
      %s292 = smul.addr %s291, 2
      %s293 = scalar_lea.vmem %s5, %s292
      %s294 = smul.u32 6, %s21
      %p295 = scmp.lt.s32.totalorder %s20, 1
      %s296 = scalar_select %p295, %s20, 1
      %p297 = scmp.lt.s32.totalorder %s294, 5
      %s298 = scalar_select %p297, %s294, 5
      %s299 = smul.addr %s296, 6
      %s300 = sadd.s32 %s298, %s299
      %s301 = smul.addr %s300, 8
      %s302 = scalar_lea.vmem %s0, %s301
      %s303 = smul.u32 6, %s21
      %p304 = scmp.lt.s32.totalorder %s20, 1
      %s305 = scalar_select %p304, %s20, 1
      %s306 = smul.addr %s305, 12
      %s307 = smul.addr %s306, 8
      %s308 = scalar_lea.vmem %s1, %s307
      %p309 = scmp.lt.s32.totalorder %s20, 1
      %s310 = scalar_select %p309, %s20, 1
      %s311 = scalar_lea.vmem %s2, %s310
      %p312 = scmp.lt.s32.totalorder %s20, 1
      %s313 = scalar_select %p312, %s20, 1
      %s314 = smul.addr %s313, 2
      %s315 = smul.addr %s314, 8
      %s316 = scalar_lea.vmem %s3, %s315
      %p317 = scmp.lt.s32.totalorder %s20, 1
      %s318 = scalar_select %p317, %s20, 1
      %s319 = scalar_lea.vmem %s4, %s318
      %p320 = scmp.lt.s32.totalorder %s20, 1
      %s321 = scalar_select %p320, %s20, 1
      %p322 = scmp.lt.s32.totalorder %s21, 0
      %s323 = scalar_select %p322, %s21, 0
      %s324 = sadd.s32 %s323, %s321
      %s325 = smul.addr %s324, 2
      %s326 = scalar_lea.vmem %s5, %s325
      %v328 = vld [vmem:[%s302] sm:$0xff]
      %v329 = vld [vmem:[%s302 + $0x8] sm:$0xff]
      %v330 = vld [vmem:[%s302 + $0x10] sm:$0xff]
      %v331 = vld [vmem:[%s302 + $0x18] sm:$0xff]
      %v332 = vld [vmem:[%s302 + $0x20] sm:$0xff]
      %v333 = vld [vmem:[%s302 + $0x28] sm:$0xff]
      %v334 = vrot.slane %v328, 1
      %v335 = vrot.slane %v329, 1
      %v336 = vrot.slane %v330, 1
      %v337 = vrot.slane %v331, 1
      %v338 = vrot.slane %v332, 1
      %v339 = vrot.slane %v333, 1
      %v340 = vlaneseq
      %v341 = vshrl.u32 %v340, 7
      %vm342 = vcmp.lt.s32.totalorder %v341, 7
      %v343 = vsel %vm342, %v338, %v339
      %v344 = vsel %vm342, %v337, %v338
      %v345 = vsel %vm342, %v336, %v337
      %v346 = vsel %vm342, %v335, %v336
      %v347 = vsel %vm342, %v334, %v335
      %v348 = vsel %vm342, %v339, %v334
      %v349 = vrot.slane %v328, 2
      %v350 = vrot.slane %v329, 2
      %v351 = vrot.slane %v330, 2
      %v352 = vrot.slane %v331, 2
      %v353 = vrot.slane %v332, 2
      %v354 = vrot.slane %v333, 2
      %vm355 = vcmp.lt.s32.totalorder %v341, 6
      %v356 = vsel %vm355, %v353, %v354
      %v357 = vsel %vm355, %v352, %v353
      %v358 = vsel %vm355, %v351, %v352
      %v359 = vsel %vm355, %v350, %v351
      %v360 = vsel %vm355, %v349, %v350
      %v361 = vsel %vm355, %v354, %v349
      %368 = vrot.lane.b32.xlu0 %v347, 32
      %v369 = vpop.permute.xlu0 %368
      %370 = vrot.lane.b32.xlu0 %v346, 32
      %v371 = vpop.permute.xlu0 %370
      %372 = vrot.lane.b32.xlu0 %v345, 32
      %v373 = vpop.permute.xlu0 %372
      %374 = vrot.lane.b32.xlu0 %v344, 32
      %v375 = vpop.permute.xlu0 %374
      %376 = vrot.lane.b32.xlu0 %v343, 32
      %v377 = vpop.permute.xlu0 %376
      %378 = vrot.lane.b32.xlu0 %v348, 32
      %v379 = vpop.permute.xlu0 %378
      %392 = vrot.lane.b32.xlu0 %v360, 64
      %v393 = vpop.permute.xlu0 %392
      %394 = vrot.lane.b32.xlu0 %v359, 64
      %v395 = vpop.permute.xlu0 %394
      %396 = vrot.lane.b32.xlu0 %v358, 64
      %v397 = vpop.permute.xlu0 %396
      %398 = vrot.lane.b32.xlu0 %v357, 64
      %v399 = vpop.permute.xlu0 %398
      %400 = vrot.lane.b32.xlu0 %v356, 64
      %v401 = vpop.permute.xlu0 %400
      %402 = vrot.lane.b32.xlu0 %v361, 64
      %v403 = vpop.permute.xlu0 %402
      %vm410 = vcmask 261120
      %v411 = vsel %vm410, %v328, %v369
      %v412 = vsel %vm410, %v329, %v371
      %v413 = vsel %vm410, %v330, %v373
      %v414 = vsel %vm410, %v331, %v375
      %v415 = vsel %vm410, %v332, %v377
      %v416 = vsel %vm410, %v333, %v379
      %vm417 = vcmask 523264
      %v418 = vsel %vm417, %v411, %v393
      %v419 = vsel %vm417, %v412, %v395
      %v420 = vsel %vm417, %v413, %v397
      %v421 = vsel %vm417, %v414, %v399
      %v422 = vsel %vm417, %v415, %v401
      %v423 = vsel %vm417, %v416, %v403
      %v424 = vpack.c.bf16 %v419, %v418
      %v425 = vpack.c.bf16 %v421, %v420
      %v426 = vpack.c.bf16 %v423, %v422
      %v427 = vld [vmem:[%s308] sm:$0xff]
      %v428 = vld [vmem:[%s308 + $0x8] sm:$0xff]
      %v429 = vld [vmem:[%s308 + $0x10] sm:$0xff]
      %v430 = vld [vmem:[%s308 + $0x18] sm:$0xff]
      %v431 = vld [vmem:[%s308 + $0x20] sm:$0xff]
      %v432 = vld [vmem:[%s308 + $0x28] sm:$0xff]
      %v433 = vld [vmem:[%s308 + $0x30] sm:$0xff]
      %v434 = vld [vmem:[%s308 + $0x38] sm:$0xff]
      %v435 = vld [vmem:[%s308 + $0x40] sm:$0xff]
      %v436 = vld [vmem:[%s308 + $0x48] sm:$0xff]
      %v437 = vld [vmem:[%s308 + $0x50] sm:$0xff]
      %v438 = vld [vmem:[%s308 + $0x58] sm:$0xff]
      %v439 = vpack.c.bf16 %v428, %v427
      %v440 = vpack.c.bf16 %v430, %v429
      %v441 = vpack.c.bf16 %v432, %v431
      %v442 = vpack.c.bf16 %v434, %v433
      %v443 = vpack.c.bf16 %v436, %v435
      %v444 = vpack.c.bf16 %v438, %v437
      %v445 = vld [vmem:[%s311] sm:$0x1]
      %v447 = vperm.slane %v445, 0
      %vm449 = vcmask 785408
      %v451 = vsel %vm449, %v424, 0
      %v454 = vsel %vm449, %v425, 0
      %v457 = vsel %vm449, %v426, 0
      %459 = vmatpush.bf16.msra.mxu0 0
      %460 = vmatpush.bf16.msra.mxu0 0
      %461 = vmatpush.bf16.msra.mxu0 %v444
      %462 = vmatpush.bf16.msra.mxu0 %v443
      %463 = vmatpush.bf16.msra.mxu0 %v442
      %464 = vmatpush.bf16.msra.mxu0 %v441
      %465 = vmatpush.bf16.msra.mxu0 %v440
      %466 = vmatpush.bf16.msra.mxu0 %v439
      %467 = vmatmul.bf16.gmra.mxu0 %v451
      %v468 = vpop.f32.mrf.mxu0
      %v469 = vadd.f32 %v447, %v468
      %v470 = vpop.f32.mrf.mxu0
      %v471 = vadd.f32 %v447, %v470
      %472 = vmatmul.bf16.gmra.mxu0 %v454
      %v473 = vpop.f32.mrf.mxu0
      %v474 = vadd.f32 %v447, %v473
      %v475 = vpop.f32.mrf.mxu0
      %v476 = vadd.f32 %v447, %v475
      %477 = vmatmul.bf16.gmra.mxu0 %v457
      %v478 = vpop.f32.mrf.mxu0
      %v479 = vadd.f32 %v447, %v478
      %v480 = vpop.f32.mrf.mxu0
      %v481 = vadd.f32 %v447, %v480
      %482 = vdwg.mxu0
      %v483 = vmax.f32 %v469, 0.0
      %v484 = vmax.f32 %v471, 0.0
      %v485 = vmax.f32 %v474, 0.0
      %v486 = vmax.f32 %v476, 0.0
      %v487 = vmax.f32 %v479, 0.0
      %v488 = vmax.f32 %v481, 0.0
      %v489 = vadd.s32 %v341, 8
      %v490 = vadd.s32 %v341, 16
      %v491 = vadd.s32 %v341, 24
      %v492 = vadd.s32 %v341, 32
      %v493 = vadd.s32 %v341, 40
      %vm494 = vcmp.lt.s32.totalorder %v341, 0
      %v495 = vsub.s32 0, %v341
      %v496 = vsel %vm494, %v495, %v341
      %v497 = vand.u32 %v496, 65535
      %v498 = vshrl.u32 %v496, 16
      %v500 = vmul.u32 %v497, 43691
      %v501 = vmul.u32 %v497, 43690
      %v502 = vmul.u32 %v498, 43691
      %v503 = vmul.u32 %v498, 43690
      %v504 = vshll.u32 %v501, 16
      %v505 = vshrl.u32 %v501, 16
      %v506 = vshll.u32 %v502, 16
      %v507 = vshrl.u32 %v502, 16
      %vm508 = vc.u32 %v500, %v504
      %v509 = vsel %vm508, 1, 0
      %v510 = vadd.s32 %v500, %v504
      %v511 = vadd.s32 %v503, %v509
      %vm512 = vc.u32 %v510, %v506
      %v513 = vsel %vm512, 1, 0
      %v514 = vadd.s32 %v510, %v506
      %v515 = vadd.s32 %v511, %v513
      %v516 = vadd.s32 %v515, %v505
      %v517 = vadd.s32 %v516, %v507
      %v518 = vshrl.u32 %v517, 4
      %v519 = vmul.u32 %v518, 24
      %v520 = vsub.s32 %v496, %v519
      %v521 = vsub.s32 0, %v520
      %v522 = vsel %vm494, %v521, %v520
      %vm523 = vcmp.lt.s32.totalorder %v489, 0
      %v524 = vsub.s32 0, %v489
      %v525 = vsel %vm523, %v524, %v489
      %v526 = vand.u32 %v525, 65535
      %v527 = vshrl.u32 %v525, 16
      %v529 = vmul.u32 %v526, 43691
      %v530 = vmul.u32 %v526, 43690
      %v531 = vmul.u32 %v527, 43691
      %v532 = vmul.u32 %v527, 43690
      %v533 = vshll.u32 %v530, 16
      %v534 = vshrl.u32 %v530, 16
      %v535 = vshll.u32 %v531, 16
      %v536 = vshrl.u32 %v531, 16
      %vm537 = vc.u32 %v529, %v533
      %v538 = vsel %vm537, 1, 0
      %v539 = vadd.s32 %v529, %v533
      %v540 = vadd.s32 %v532, %v538
      %vm541 = vc.u32 %v539, %v535
      %v542 = vsel %vm541, 1, 0
      %v543 = vadd.s32 %v539, %v535
      %v544 = vadd.s32 %v540, %v542
      %v545 = vadd.s32 %v544, %v534
      %v546 = vadd.s32 %v545, %v536
      %v547 = vshrl.u32 %v546, 4
      %v548 = vmul.u32 %v547, 24
      %v549 = vsub.s32 %v525, %v548
      %v550 = vsub.s32 0, %v549
      %v551 = vsel %vm523, %v550, %v549
      %vm552 = vcmp.lt.s32.totalorder %v490, 0
      %v553 = vsub.s32 0, %v490
      %v554 = vsel %vm552, %v553, %v490
      %v555 = vand.u32 %v554, 65535
      %v556 = vshrl.u32 %v554, 16
      %v558 = vmul.u32 %v555, 43691
      %v559 = vmul.u32 %v555, 43690
      %v560 = vmul.u32 %v556, 43691
      %v561 = vmul.u32 %v556, 43690
      %v562 = vshll.u32 %v559, 16
      %v563 = vshrl.u32 %v559, 16
      %v564 = vshll.u32 %v560, 16
      %v565 = vshrl.u32 %v560, 16
      %vm566 = vc.u32 %v558, %v562
      %v567 = vsel %vm566, 1, 0
      %v568 = vadd.s32 %v558, %v562
      %v569 = vadd.s32 %v561, %v567
      %vm570 = vc.u32 %v568, %v564
      %v571 = vsel %vm570, 1, 0
      %v572 = vadd.s32 %v568, %v564
      %v573 = vadd.s32 %v569, %v571
      %v574 = vadd.s32 %v573, %v563
      %v575 = vadd.s32 %v574, %v565
      %v576 = vshrl.u32 %v575, 4
      %v577 = vmul.u32 %v576, 24
      %v578 = vsub.s32 %v554, %v577
      %v579 = vsub.s32 0, %v578
      %v580 = vsel %vm552, %v579, %v578
      %vm581 = vcmp.lt.s32.totalorder %v491, 0
      %v582 = vsub.s32 0, %v491
      %v583 = vsel %vm581, %v582, %v491
      %v584 = vand.u32 %v583, 65535
      %v585 = vshrl.u32 %v583, 16
      %v587 = vmul.u32 %v584, 43691
      %v588 = vmul.u32 %v584, 43690
      %v589 = vmul.u32 %v585, 43691
      %v590 = vmul.u32 %v585, 43690
      %v591 = vshll.u32 %v588, 16
      %v592 = vshrl.u32 %v588, 16
      %v593 = vshll.u32 %v589, 16
      %v594 = vshrl.u32 %v589, 16
      %vm595 = vc.u32 %v587, %v591
      %v596 = vsel %vm595, 1, 0
      %v597 = vadd.s32 %v587, %v591
      %v598 = vadd.s32 %v590, %v596
      %vm599 = vc.u32 %v597, %v593
      %v600 = vsel %vm599, 1, 0
      %v601 = vadd.s32 %v597, %v593
      %v602 = vadd.s32 %v598, %v600
      %v603 = vadd.s32 %v602, %v592
      %v604 = vadd.s32 %v603, %v594
      %v605 = vshrl.u32 %v604, 4
      %v606 = vmul.u32 %v605, 24
      %v607 = vsub.s32 %v583, %v606
      %v608 = vsub.s32 0, %v607
      %v609 = vsel %vm581, %v608, %v607
      %vm610 = vcmp.lt.s32.totalorder %v492, 0
      %v611 = vsub.s32 0, %v492
      %v612 = vsel %vm610, %v611, %v492
      %v613 = vand.u32 %v612, 65535
      %v614 = vshrl.u32 %v612, 16
      %v616 = vmul.u32 %v613, 43691
      %v617 = vmul.u32 %v613, 43690
      %v618 = vmul.u32 %v614, 43691
      %v619 = vmul.u32 %v614, 43690
      %v620 = vshll.u32 %v617, 16
      %v621 = vshrl.u32 %v617, 16
      %v622 = vshll.u32 %v618, 16
      %v623 = vshrl.u32 %v618, 16
      %vm624 = vc.u32 %v616, %v620
      %v625 = vsel %vm624, 1, 0
      %v626 = vadd.s32 %v616, %v620
      %v627 = vadd.s32 %v619, %v625
      %vm628 = vc.u32 %v626, %v622
      %v629 = vsel %vm628, 1, 0
      %v630 = vadd.s32 %v626, %v622
      %v631 = vadd.s32 %v627, %v629
      %v632 = vadd.s32 %v631, %v621
      %v633 = vadd.s32 %v632, %v623
      %v634 = vshrl.u32 %v633, 4
      %v635 = vmul.u32 %v634, 24
      %v636 = vsub.s32 %v612, %v635
      %v637 = vsub.s32 0, %v636
      %v638 = vsel %vm610, %v637, %v636
      %vm639 = vcmp.lt.s32.totalorder %v493, 0
      %v640 = vsub.s32 0, %v493
      %v641 = vsel %vm639, %v640, %v493
      %v642 = vand.u32 %v641, 65535
      %v643 = vshrl.u32 %v641, 16
      %v645 = vmul.u32 %v642, 43691
      %v646 = vmul.u32 %v642, 43690
      %v647 = vmul.u32 %v643, 43691
      %v648 = vmul.u32 %v643, 43690
      %v649 = vshll.u32 %v646, 16
      %v650 = vshrl.u32 %v646, 16
      %v651 = vshll.u32 %v647, 16
      %v652 = vshrl.u32 %v647, 16
      %vm653 = vc.u32 %v645, %v649
      %v654 = vsel %vm653, 1, 0
      %v655 = vadd.s32 %v645, %v649
      %v656 = vadd.s32 %v648, %v654
      %vm657 = vc.u32 %v655, %v651
      %v658 = vsel %vm657, 1, 0
      %v659 = vadd.s32 %v655, %v651
      %v660 = vadd.s32 %v656, %v658
      %v661 = vadd.s32 %v660, %v650
      %v662 = vadd.s32 %v661, %v652
      %v663 = vshrl.u32 %v662, 4
      %v664 = vmul.u32 %v663, 24
      %v665 = vsub.s32 %v641, %v664
      %v666 = vsub.s32 0, %v665
      %v667 = vsel %vm639, %v666, %v665
      %vm668 = vcmp.ne.s32.totalorder %v522, 0
      %vm669 = vcmp.ne.s32.totalorder %v551, 0
      %vm670 = vcmp.ne.s32.totalorder %v580, 0
      %vm671 = vcmp.ne.s32.totalorder %v609, 0
      %vm672 = vcmp.ne.s32.totalorder %v638, 0
      %vm673 = vcmp.ne.s32.totalorder %v667, 0
      %vm674 = vcmp.lt.s32.totalorder %v522, 0
      %vm675 = vcmp.lt.s32.totalorder %v551, 0
      %vm676 = vcmp.lt.s32.totalorder %v580, 0
      %vm677 = vcmp.lt.s32.totalorder %v609, 0
      %vm678 = vcmp.lt.s32.totalorder %v638, 0
      %vm679 = vcmp.lt.s32.totalorder %v667, 0
      %vm680 = vmand %vm674, %vm668
      %vm681 = vmand %vm675, %vm669
      %vm682 = vmand %vm676, %vm670
      %vm683 = vmand %vm677, %vm671
      %vm684 = vmand %vm678, %vm672
      %vm685 = vmand %vm679, %vm673
      %v686 = vadd.s32 %v522, 24
      %v687 = vadd.s32 %v551, 24
      %v688 = vadd.s32 %v580, 24
      %v689 = vadd.s32 %v609, 24
      %v690 = vadd.s32 %v638, 24
      %v691 = vadd.s32 %v667, 24
      %v692 = vsel %vm680, %v686, %v522
      %v693 = vsel %vm681, %v687, %v551
      %v694 = vsel %vm682, %v688, %v580
      %v695 = vsel %vm683, %v689, %v609
      %v696 = vsel %vm684, %v690, %v638
      %v697 = vsel %vm685, %v691, %v667
      %vm698 = vcmp.lt.s32.totalorder %v692, 22
      %vm699 = vcmp.lt.s32.totalorder %v693, 22
      %vm700 = vcmp.lt.s32.totalorder %v694, 22
      %vm701 = vcmp.lt.s32.totalorder %v695, 22
      %vm702 = vcmp.lt.s32.totalorder %v696, 22
      %vm703 = vcmp.lt.s32.totalorder %v697, 22
      %v704 = vsel %vm698, 1, 0
      %v705 = vsel %vm699, 1, 0
      %v706 = vsel %vm700, 1, 0
      %v707 = vsel %vm701, 1, 0
      %v708 = vsel %vm702, 1, 0
      %v709 = vsel %vm703, 1, 0
      %vm710 = vcmp.eq.s32.totalorder %v704, 1
      %vm711 = vcmp.eq.s32.totalorder %v705, 1
      %vm712 = vcmp.eq.s32.totalorder %v706, 1
      %vm713 = vcmp.eq.s32.totalorder %v707, 1
      %vm714 = vcmp.eq.s32.totalorder %v708, 1
      %vm715 = vcmp.eq.s32.totalorder %v709, 1
      %v716 = vsel %vm710, %v483, 0.0
      %v717 = vsel %vm711, %v484, 0.0
      %v718 = vsel %vm712, %v485, 0.0
      %v719 = vsel %vm713, %v486, 0.0
      %v720 = vsel %vm714, %v487, 0.0
      %v721 = vsel %vm715, %v488, 0.0
      %vm722 = vcmask 130048
      %v723 = vsel %vm722, %v716, -inf
      %v724 = vsel %vm722, %v717, -inf
      %v725 = vsel %vm722, %v718, -inf
      %v726 = vmax.f32 %v723, %v725
      %v727 = vmax.f32 %v726, %v724
      %v728 = vrot.slane %v727, 4
      %v729 = vmax.f32 %v727, %v728
      %v730 = vrot.slane %v729, 2
      %v731 = vmax.f32 %v729, %v730
      %v732 = vrot.slane %v731, 1
      %v733 = vmax.f32 %v731, %v732
      %v734 = vsel %vm722, %v719, -inf
      %v735 = vsel %vm722, %v720, -inf
      %v736 = vsel %vm722, %v721, -inf
      %v737 = vmax.f32 %v734, %v736
      %v738 = vmax.f32 %v737, %v735
      %v739 = vrot.slane %v738, 4
      %v740 = vmax.f32 %v738, %v739
      %v741 = vrot.slane %v740, 2
      %v742 = vmax.f32 %v740, %v741
      %v743 = vrot.slane %v742, 1
      %v744 = vmax.f32 %v742, %v743
      %v745 = vpack.c.bf16 %v733, %v733
      %v746 = vpack.c.bf16 %v744, %v744
      %v747 = vld [vmem:[%s316] sm:$0xff]
      %v748 = vld [vmem:[%s316 + $0x8] sm:$0xff]
      %v749 = vpack.c.bf16 %v748, %v747
      %v750 = vld [vmem:[%s319] sm:$0x1]
      %v752 = vperm.slane %v750, 0
      %v756 = vunpack.c.l.b16 %v745
      %v757 = vunpack.c.l.b16 %v746
      %vm758 = vcmask 1041409
      %v759 = vsel %vm758, %v757, %v756
      %v760 = vpack.c.b16 %v759, %v759
      %v762 = vsel %vm722, %v760, 0
      %764 = vmatpush.bf16.msra.mxu0 0
      %765 = vmatpush.bf16.msra.mxu0 0
      %766 = vmatpush.bf16.msra.mxu0 0
      %767 = vmatpush.bf16.msra.mxu0 0
      %768 = vmatpush.bf16.msra.mxu0 0
      %769 = vmatpush.bf16.msra.mxu0 0
      %770 = vmatpush.bf16.msra.mxu0 0
      %771 = vmatpush.bf16.msra.mxu0 %v749
      %772 = vmatmul.bf16.gmra.mxu0 %v762
      %v773 = vpop.f32.mrf.mxu0
      %v774 = vadd.f32 %v752, %v773
      %v775 = vpop.f32.mrf.mxu0
      %776 = vdwg.mxu0
      %vm777 = vcmask 58368
      %778 = vst.msk [vmem:[%s326] sm:$0x3] %vm777, %v774
      %p779 = scmp.lt.s32.totalorder %s20, 1
      %s780 = scalar_select %p779, %s20, 1
      %p781 = scmp.lt.s32.totalorder %s21, 0
      %s782 = scalar_select %p781, %s21, 0
      %s783 = sadd.s32 %s782, %s780
      %s784 = smul.addr %s783, 2
      %s785 = scalar_lea.vmem %s5, %s784
      // Predicated region
      $region41: #{deepconn_forward.1} parent=39 // pred_check
        %p786 = pneg %p180
      $region42: #{deepconn_forward.1} parent=39 // pred_check_branch
        %788 = sbr.rel (%p786) target = $region44
      $region43: #{deepconn_forward.1} parent=39 // pred_region
        _
      $region44: #{deepconn_forward.1} parent=39 // pred_fallthru
        _
    $region40: #{deepconn_forward.1} parent=5 // pred_fallthru
      _
    %p789 = scmp.le.s32.totalorder 2, %s11
    // Predicated region
    $region45: #{deepconn_forward.1} parent=5 // pred_check
      %p790 = pneg %p789
    $region46: #{deepconn_forward.1} parent=5 // pred_check_branch
      %792 = sbr.rel (%p790) target = $region48
    $region47: #{deepconn_forward.1} parent=5 // pred_region
      %s793 = ssub.s32 %s11, 2
      // Predicated region
      $region49: #{deepconn_forward.1} parent=47 // pred_check
        %p794 = pneg %p186
      $region50: #{deepconn_forward.1} parent=47 // pred_check_branch
        %796 = sbr.rel (%p794) target = $region52
      $region51: #{deepconn_forward.1} parent=47 // pred_region
        %p797 = scmp.lt.s32.totalorder %s22, 1
        %s798 = scalar_select %p797, %s22, 1
        %p799 = scmp.lt.s32.totalorder %s23, 0
        %s800 = scalar_select %p799, %s23, 0
        %s801 = sadd.s32 %s800, %s798
        %s802 = smul.addr %s801, 2
        %s803 = scalar_lea.vmem %s5, %s802
      $region52: #{deepconn_forward.1} parent=47 // pred_fallthru
        _
    $region48: #{deepconn_forward.1} parent=5 // pred_fallthru
      _
  $region6: #{deepconn_forward.1} parent=0 // loop_footer
    %s15 = sadd.s32 1, %s11
  $region7: #{deepconn_forward.1} parent=0 // loop_footer_branch
    %10 = sbr.rel target = $region3
  $region8: #{deepconn_forward.1} parent=0 // loop_exit
    _

</llo_original>
